<compile_context>
chip_gen: v7x
topology: tpu7x:2x2x1
jax: 0.10.0
libtpu: 0.0.40
codegen_flags: <defaults>
</compile_context>

<pallas_src>
import jax
import jax.numpy as jnp
from jax.experimental import pallas as pl
from jax.experimental.pallas import tpu as pltpu


def _star_relu_kernel(scale_ref, bias_ref, x_ref, o_ref):
    # scale/bias are f32 scalars in SMEM; compute in f32 for numerics
    # (avoids bf16/fp16 precision loss / fp16 overflow in the square).
    scale = scale_ref[0]
    bias = bias_ref[0]
    x = x_ref[...].astype(jnp.float32)
    r = jnp.maximum(x, 0.0)                       # ReLU
    o_ref[...] = (scale * (r * r) + bias).astype(o_ref.dtype)


def _tpu_hints():
    """Returns (target_block_bytes, multi_core_chip) for the local TPU generation."""
    try:
        vmem = int(getattr(pltpu.get_tpu_info(), "vmem_capacity_bytes", 128 << 20))
    except Exception:  # interpret mode / unknown backend -> conservative defaults
        vmem = 128 << 20
    if vmem <= (96 << 20):   # v7x-class: 64 MiB VMEM per TC, 2 TCs/chip
        return 8 << 20, True
    return 16 << 20, False   # v5e/v6e: 128 MiB VMEM, 1 TC/chip


def _launch(x2d, block_shape, grid, scale, bias, vmem_limit, multi_core):
    if multi_core and grid[0] >= 2:
        semantics = (pltpu.CORE_PARALLEL,)    # actually engage both v7x TensorCores
    else:
        semantics = ("parallel",)
    return pl.pallas_call(
        _star_relu_kernel,
        out_shape=jax.ShapeDtypeStruct(x2d.shape, x2d.dtype),
        grid_spec=pltpu.PrefetchScalarGridSpec(
            num_scalar_prefetch=0,
            grid=grid,
            in_specs=[
                pl.BlockSpec(memory_space=pltpu.MemorySpace.SMEM),   # scale (1,) f32
                pl.BlockSpec(memory_space=pltpu.MemorySpace.SMEM),   # bias  (1,) f32
                pl.BlockSpec(block_shape, lambda i: (i, 0)),
            ],
            out_specs=pl.BlockSpec(block_shape, lambda i: (i, 0)),
        ),
        compiler_params=pltpu.CompilerParams(
            dimension_semantics=semantics,
            vmem_limit_bytes=int(vmem_limit),
        ),
    )(scale, bias, x2d)


def star_relu(x, scale, bias):
    """StarReLU forward: scale * relu(x)**2 + bias. Any input shape / float dtype."""
    orig_shape = x.shape
    n = x.size
    itemsize = jnp.dtype(x.dtype).itemsize
    scale = jnp.asarray(scale, dtype=jnp.float32).reshape((1,))
    bias = jnp.asarray(bias, dtype=jnp.float32).reshape((1,))

    target_block_bytes, multi_core = _tpu_hints()
    # Sub-32-bit dtypes pack rows along sublanes: native tile is (8*pack, 128).
    sublane_mult = 8 * max(1, 4 // itemsize)

    if n % 128 == 0:
        # Main path: lane-dense 2D slab using the widest 128-multiple divisor.
        lanes = 128
        for cand in (32768, 16384, 8192, 4096, 2048, 1024, 512, 256, 128):
            if n % cand == 0:
                lanes = cand
                break
        m = n // lanes
        x2d = jnp.reshape(x, (m, lanes))
        block_rows = min(m, max(1, target_block_bytes // (lanes * itemsize)))
        if block_rows != m:
            # Round to the dtype's native sublane multiple; clamp to full dim.
            block_rows = max(sublane_mult, (block_rows // sublane_mult) * sublane_mult)
            block_rows = min(block_rows, m)
        block_shape = (block_rows, lanes)
        grid = (pl.cdiv(m, block_rows),)
        vmem_limit = 4 * block_rows * lanes * itemsize + (8 << 20)
    else:
        # Awkward sizes: view as (1, n); no host-side pad or trailing-slice passes.
        x2d = jnp.reshape(x, (1, n))
        max_l = 131072  # multiple of 128; keeps single-row VMEM sublane padding tame
        if n > max_l:
            lanes = max_l                      # 128-divisible block lane width
            grid = (pl.cdiv(n, lanes),)        # ragged final block masked by Pallas
        else:
            lanes = n                          # block == full array dims: always legal
            grid = (1,)
        block_shape = (1, lanes)
        # Single-row VMEM tiles pad sublanes up to 8x; budget conservatively.
        vmem_limit = 4 * 8 * lanes * itemsize + (8 << 20)

    out2d = _launch(x2d, block_shape, grid, scale, bias, vmem_limit, multi_core)
    return jnp.reshape(out2d, orig_shape)


if __name__ == "__main__":
    key = jax.random.PRNGKey(0)
    k1, k2, k3 = jax.random.split(key, 3)

    # Case 1: NCHW conv-feature-like input (size divides 128 -> main 2D path).
    x1 = jax.random.normal(k1, (2, 4, 16, 16), dtype=jnp.float32)
    scale1 = 1.0 * jnp.ones((1,), dtype=jnp.float32)   # StarReLU defaults
    bias1 = 0.0 * jnp.ones((1,), dtype=jnp.float32)
    out1 = jax.block_until_ready(star_relu(x1, scale1, bias1))
    ref1 = scale1[0] * jnp.maximum(x1, 0.0) ** 2 + bias1[0]
    assert out1.shape == x1.shape and out1.dtype == x1.dtype
    assert jnp.allclose(out1, ref1, atol=1e-6), "mismatch vs reference (case 1)"

    # Case 2: awkward size (1155 elements, not a multiple of 128 -> (1, n) path,
    # no host-side pad/slice), non-trivial learnable scalars.
    x2 = jax.random.normal(k2, (3, 5, 7, 11), dtype=jnp.float32)
    scale2 = 0.8944 * jnp.ones((1,), dtype=jnp.float32)
    bias2 = -0.4472 * jnp.ones((1,), dtype=jnp.float32)
    out2 = jax.block_until_ready(star_relu(x2, scale2, bias2))
    ref2 = scale2[0] * jnp.maximum(x2, 0.0) ** 2 + bias2[0]
    assert out2.shape == x2.shape and out2.dtype == x2.dtype
    assert jnp.allclose(out2, ref2, atol=1e-5), "mismatch vs reference (case 2)"

    # Case 3: bf16 input (exercises in-kernel f32 compute + cast-on-store path).
    x3 = jax.random.normal(k3, (4, 64, 128), dtype=jnp.float32).astype(jnp.bfloat16)
    scale3 = 1.25 * jnp.ones((1,), dtype=jnp.float32)
    bias3 = 0.5 * jnp.ones((1,), dtype=jnp.float32)
    out3 = jax.block_until_ready(star_relu(x3, scale3, bias3))
    ref3 = scale3[0] * jnp.maximum(x3.astype(jnp.float32), 0.0) ** 2 + bias3[0]
    assert out3.shape == x3.shape and out3.dtype == x3.dtype
    assert jnp.allclose(out3.astype(jnp.float32), ref3, atol=5e-2, rtol=2e-2), \
        "mismatch vs reference (case 3)"

    print("KERNEL_OK")
</pallas_src>

<mosaic_0001>
module attributes {stable_mosaic.version = 11 : i64} {
  func.func @_star_relu_kernel(%arg0: i32, %arg1: memref<1xf32, #tpu.memory_space<smem>>, %arg2: memref<1xf32, #tpu.memory_space<smem>>, %arg3: memref<1x2048xf32, #tpu.memory_space<vmem>>, %arg4: memref<1x2048xf32, #tpu.memory_space<vmem>>) attributes {dimension_semantics = [#tpu.dimension_semantics<parallel>], iteration_bounds = array<i64: 1>, scalar_prefetch = 0 : i64, scratch_operands = 0 : i64, tpu.core_type = #tpu.core_type<tc>, window_params = [{transform_indices = @transform_0, window_bounds = array<i64: 1>}, {transform_indices = @transform_1, window_bounds = array<i64: 1>}, {transform_indices = @transform_2, window_bounds = array<i64: 1, 2048>}, {transform_indices = @transform_3, window_bounds = array<i64: 1, 2048>}]} {
    %c0 = arith.constant 0 : index
    %0 = memref.load %arg1[%c0] : memref<1xf32, #tpu.memory_space<smem>>
    %c0_0 = arith.constant 0 : index
    %1 = memref.load %arg2[%c0_0] : memref<1xf32, #tpu.memory_space<smem>>
    %c0_1 = arith.constant 0 : index
    %c0_2 = arith.constant 0 : index
    %2 = vector.load %arg3[%c0_1, %c0_2] : memref<1x2048xf32, #tpu.memory_space<vmem>>, vector<1x2048xf32>
    %cst = arith.constant 0.000000e+00 : f32
    %3 = vector.broadcast %cst : f32 to vector<1x2048xf32>
    %4 = arith.maximumf %2, %3 : vector<1x2048xf32>
    %5 = arith.mulf %4, %4 : vector<1x2048xf32>
    %6 = vector.broadcast %0 : f32 to vector<1x2048xf32>
    %7 = arith.mulf %6, %5 : vector<1x2048xf32>
    %8 = vector.broadcast %1 : f32 to vector<1x2048xf32>
    %9 = arith.addf %7, %8 : vector<1x2048xf32>
    %c0_3 = arith.constant 0 : index
    %c0_4 = arith.constant 0 : index
    %10 = vector.load %arg4[%c0_3, %c0_4] : memref<1x2048xf32, #tpu.memory_space<vmem>>, vector<1x2048xf32>
    tpu.vector_store %arg4[%c0_3, %c0_4], %9 {strides = array<i32>} : memref<1x2048xf32, #tpu.memory_space<vmem>>, vector<1x2048xf32>,
    return
  }
  func.func @transform_0(%arg0: i32) -> i32 {
    %c0_i32 = arith.constant 0 : i32
    %c0_i32_0 = arith.constant 0 : i32
    return %c0_i32 : i32
  }
  func.func @transform_1(%arg0: i32) -> i32 {
    %c0_i32 = arith.constant 0 : i32
    %c0_i32_0 = arith.constant 0 : i32
    return %c0_i32 : i32
  }
  func.func @transform_2(%arg0: i32) -> (i32, i32) {
    %c0_i32 = arith.constant 0 : i32
    %c0_i32_0 = arith.constant 0 : i32
    return %arg0, %c0_i32 : i32, i32
  }
  func.func @transform_3(%arg0: i32) -> (i32, i32) {
    %c0_i32 = arith.constant 0 : i32
    %c0_i32_0 = arith.constant 0 : i32
    return %arg0, %c0_i32 : i32, i32
  }
}

</mosaic_0001>

<llo_original>
// kernel: tpu_custom_call.1
$region0: #{tpu_custom_call.1}
  #allocation0 [shape = 'u32[]', space=smem, size = 0x4, offset = 0x4, fixed_abs, tag = 'smem constant byte address 0x4 - core index']
  #allocation1 [shape = 'u32[144,128]{1,0:T(1,128)}', space=vmem, size = 0x12000, scoped, tag = 'internal scratch']
  #allocation2 [shape = 'f32[1]{0:T(128)S(6)}', space=smem, size = 0x200, scoped, tag = 'scoped memory for tpu_custom_call.1']
  #allocation3 [shape = 'f32[1]{0:T(128)S(6)}', space=smem, size = 0x200, scoped, tag = 'scoped memory for tpu_custom_call.1']
  %s0 = inlined_call_operand.<no memory space> [shape: f32[1], index: 0, kind: input, shape index: {}]
  %s1 = inlined_call_operand.<no memory space> [shape: f32[1], index: 1, kind: input, shape index: {}]
  %s2 = inlined_call_operand.hbm [shape: f32[1,2048], index: 2, kind: input, shape index: {}]
  %s3 = inlined_call_operand.hbm [shape: f32[1,2048], index: 3, kind: output, shape index: {}]
  %s4 = sld [smem:[#allocation0]]
  $region26: #{tpu_custom_call.1} parent=0
    _
  %s6 = ssub.s32 1, %s4
  %s7 = scalar_select 0, %s6, %s4
  %8 = sst [smem:[#allocation2]] %s0
  %9 = sst [smem:[#allocation3]] %s1
  $region1: #{tpu_custom_call.1} parent=0
    #allocation4 [shape = 'u8[8192]{0}', space=vmem, size = 0x2000, scoped, tag = 'input window, operand 2, single buffered']
    #allocation5 [shape = 's32[1]{0}', space=sflag, size = 0x4, scoped, tag = 'scoped memory for tpu_custom_call.1']
    #allocation6 [shape = 's32[1]{0}', space=sflag, size = 0x4, scoped, tag = 'scoped memory for tpu_custom_call.1']
    #allocation7 [shape = 'u8[8192]{0}', space=vmem, size = 0x2000, scoped, tag = 'output window, operand 0, single buffered']
    %10 = vsyncpa [#allocation5], 0
    %11 = vsyncpa [#allocation6], 0
    // Predicated region
    $region2: #{tpu_custom_call.1} parent=1 // pred_check
      _
    $region3: #{tpu_custom_call.1} parent=1 // pred_check_branch
      %13 = sbr.rel (0) target = $region5
    $region4: #{tpu_custom_call.1} parent=1 // pred_region
      _
    $region5: #{tpu_custom_call.1} parent=1 // pred_fallthru
      _
    // Predicated region
    $region6: #{tpu_custom_call.1} parent=1 // pred_check
      _
    $region7: #{tpu_custom_call.1} parent=1 // pred_check_branch
      %15 = sbr.rel (0) target = $region9
    $region8: #{tpu_custom_call.1} parent=1 // pred_region
      _
    $region9: #{tpu_custom_call.1} parent=1 // pred_fallthru
      _
    // Predicated region
    $region10: #{tpu_custom_call.1} parent=1 // pred_check
      _
    $region11: #{tpu_custom_call.1} parent=1 // pred_check_branch
      %17 = sbr.rel (0) target = $region13
    $region12: #{tpu_custom_call.1} parent=1 // pred_region
      %s19 = ssub.s32 256, 256
      %20 = vsyncadd [#allocation5], %s19
      %s22 = sshll.u32 [#allocation4], 4
      %s23 = int_to_ptr.vmem [resolvable:$true] %s22
      %25 = dma.hbm_to_vmem [thread:$0]  %s2, 256, %s23, [#allocation5]
    $region13: #{tpu_custom_call.1} parent=1 // pred_fallthru
      _
    // Predicated region
    $region14: #{tpu_custom_call.1} parent=1 // pred_check
      _
    $region15: #{tpu_custom_call.1} parent=1 // pred_check_branch
      %27 = sbr.rel (0) target = $region17
    $region16: #{tpu_custom_call.1} parent=1 // pred_region
      %28 = dma.done [#allocation5], 256
    $region17: #{tpu_custom_call.1} parent=1 // pred_fallthru
      _
    %s29 = sld [smem:[#allocation2]]
    %s30 = sld [smem:[#allocation3]]
    %v31 = vld [vmem:[#allocation4] sm:$0xff]
    %v32 = vld [vmem:[#allocation4 + $0x8] sm:$0xff]
    %v33 = vmax.f32 %v31, 0.0
    %v34 = vmax.f32 %v32, 0.0
    %v35 = vmul.f32 %v33, %v33
    %v36 = vmul.f32 %v34, %v34
    %v37 = vstv %s29
    %v38 = vmul.f32 %v37, %v35
    %v39 = vmul.f32 %v37, %v36
    %v40 = vstv %s30
    %v41 = vadd.f32 %v38, %v40
    %v42 = vadd.f32 %v39, %v40
    %43 = vst [vmem:[#allocation7] sm:$0xff] %v41
    %44 = vst [vmem:[#allocation7 + $0x8] sm:$0xff] %v42
    // Predicated region
    $region18: #{tpu_custom_call.1} parent=1 // pred_check
      _
    $region19: #{tpu_custom_call.1} parent=1 // pred_check_branch
      %46 = sbr.rel (0) target = $region21
    $region20: #{tpu_custom_call.1} parent=1 // pred_region
      %s48 = ssub.s32 256, 256
      %49 = vsyncadd [#allocation6], %s48
      %s51 = sshll.u32 [#allocation7], 4
      %s52 = int_to_ptr.vmem [resolvable:$true] %s51
      %54 = dma.vmem_to_hbm [thread:$0]  %s52, 256, %s3, [#allocation6]
    $region21: #{tpu_custom_call.1} parent=1 // pred_fallthru
      _
    // Predicated region
    $region22: #{tpu_custom_call.1} parent=1 // pred_check
      _
    $region23: #{tpu_custom_call.1} parent=1 // pred_check_branch
      %56 = sbr.rel (0) target = $region25
    $region24: #{tpu_custom_call.1} parent=1 // pred_region
      %57 = dma.done [#allocation6], 256
    $region25: #{tpu_custom_call.1} parent=1 // pred_fallthru
      _
    %58 = vsyncpa [#allocation5], 1
    %59 = vsyncpa [#allocation6], 1

</llo_original>
